<compile_context>
chip_gen: v6e
topology: v6e:2x2x1
jax: 0.10.0
libtpu: 0.0.40
codegen_flags: <defaults>
</compile_context>

<pallas_src>
import math
import functools

import jax
import jax.numpy as jnp
from jax import lax
from jax.experimental import pallas as pl
from jax.experimental.pallas import tpu as pltpu

EPS = 1e-5
ACT_DTYPE = jnp.bfloat16   # intermediate activation storage (halves HBM traffic)
MM_DTYPE = jnp.bfloat16    # MXU operand dtype (accumulation stays f32)


# ----------------------------- sinusoidal encodings (glue, plain JAX) -------

def get_1d_pos_encode(embed_dim, pos):
    pos = jnp.asarray(pos, jnp.float32)
    half = embed_dim // 2
    omega = 1.0 / (10000.0 ** (jnp.arange(half, dtype=jnp.float32) / half))
    ang = pos[:, None] * omega[None, :]
    return jnp.concatenate([jnp.sin(ang), jnp.cos(ang)], axis=-1)  # (len(pos), D)


def get_2d_patched_lat_lon_encode(embed_dim, lat, lon, patch_size):
    lat_p = lat.reshape(-1, patch_size).mean(-1)   # (H/p,)
    lon_p = lon.reshape(-1, patch_size).mean(-1)   # (W/p,)
    lat_g = jnp.repeat(lat_p, lon_p.shape[0])
    lon_g = jnp.tile(lon_p, lat_p.shape[0])
    pos = jnp.concatenate([get_1d_pos_encode(embed_dim // 2, lat_g),
                           get_1d_pos_encode(embed_dim // 2, lon_g)], axis=-1)  # (L, D)
    dlat = jnp.abs(lat_p[1] - lat_p[0]) if lat_p.shape[0] > 1 else jnp.asarray(1.0)
    dlon = jnp.abs(lon_p[1] - lon_p[0]) if lon_p.shape[0] > 1 else jnp.asarray(1.0)
    scale = jnp.concatenate([get_1d_pos_encode(embed_dim // 2, dlat[None]),
                             get_1d_pos_encode(embed_dim // 2, dlon[None])], axis=-1)
    scale = jnp.broadcast_to(scale, pos.shape)
    return pos, scale


# ----------------------------- tiling / platform helpers --------------------

def _pick_divisor(n, target, mults=(1,)):
    """Largest divisor t of n with t <= target, preferring t % mult == 0 for the
    given mults (tried in order).  Never silently blows up to n: worst case is the
    largest plain divisor <= target (>= 1)."""
    target = max(1, min(n, int(target)))
    for mult in mults:
        for t in range(target, 0, -1):
            if n % t == 0 and t % mult == 0:
                return t
    return 1


@functools.lru_cache(maxsize=1)
def _vmem_budget():
    """(physical VMEM capacity, scoped vmem_limit_bytes to request)."""
    try:
        cap = int(pltpu.get_tpu_info().vmem_capacity_bytes)
    except Exception:
        cap = 64 * 1024 * 1024           # conservative (v7x per-TC)
    limit = min((cap * 3) // 4, 96 * 1024 * 1024)   # ~48 MiB on v7x, 96 MiB on v5e/v6e
    return cap, limit


@functools.lru_cache(maxsize=1)
def _single_buffering_supported():
    """Probe once whether pipeline_mode=pl.Buffered(1) lowers on this Pallas build."""
    try:
        def _probe_kernel(x_ref, o_ref):
            o_ref[...] = x_ref[...] * 2.0
        x = jnp.ones((8, 128), jnp.float32)
        out = pl.pallas_call(
            _probe_kernel,
            out_shape=jax.ShapeDtypeStruct((16, 128), jnp.float32),
            grid=(2,),
            in_specs=[pl.BlockSpec((8, 128), lambda i: (0, 0),
                                   pipeline_mode=pl.Buffered(1))],
            out_specs=pl.BlockSpec((8, 128), lambda i: (i, 0)),
        )(x)
        jax.block_until_ready(out)
        return True
    except Exception:
        return False


def _const_spec(shape):
    """BlockSpec with a constant block index (DMA'd once).  Single-buffered when the
    installed Pallas supports pipeline_mode=pl.Buffered(1) (saves a full weight copy
    of VMEM per constant block)."""
    nd = len(shape)
    idx = lambda *args, _nd=nd: (0,) * _nd
    if _single_buffering_supported():
        return pl.BlockSpec(shape, idx, pipeline_mode=pl.Buffered(1))
    return pl.BlockSpec(shape, idx)


# ----------------------------- Pallas kernel 1: grouped var patch embed -----

def _patch_embed_kernel(ids_ref, patch_ref, w_ref, b_ref, g_ref, beta_ref, out_ref):
    del ids_ref  # only used by the index maps
    pshape = patch_ref.shape
    patches = patch_ref[...].reshape(-1, pshape[-1])                     # (M, P2) bf16
    y = jnp.dot(patches.astype(MM_DTYPE), w_ref[0],
                preferred_element_type=jnp.float32)
    y = y + b_ref[0].astype(jnp.float32)                                 # (M, D)
    mu = jnp.mean(y, axis=-1, keepdims=True)
    var = jnp.mean((y - mu) ** 2, axis=-1, keepdims=True)
    y = (y - mu) * lax.rsqrt(var + EPS)
    y = y * g_ref[...].astype(jnp.float32) + beta_ref[...].astype(jnp.float32)
    out_ref[...] = y.reshape(out_ref.shape).astype(out_ref.dtype)


def grouped_patch_embed(x, var_ids, w, b, gamma, beta, patch_size, embed_dim,
                        out_group=None, out_dtype=ACT_DTYPE):
    """StableGroupedVarPatchEmbed: per-variable patch projection + shared LayerNorm.

    x: (BT, V, H, W).  If out_group=(G0, G1) with G0*G1 == V the result is written
    directly as (BT, G0, G1, L, D) via the output index_map (no unflatten pass).
    """
    BT, V, H, W = x.shape
    ps = patch_size
    Lh, Lw = H // ps, W // ps
    L = Lh * Lw
    P2 = ps * ps
    D = embed_dim

    # TODO(synk): fold the patchify into the kernel (whole image-row-stripe BlockSpec +
    # in-kernel (ps, Lw, ps) rearrange) to remove this HBM pass entirely; kept out of the
    # kernel because the rank-5 minor transpose is not reliably lowerable by Mosaic.  The
    # pass now emits bf16, so the kernel reads half the bytes it used to.
    patches = x.reshape(BT, V, Lh, ps, Lw, ps).transpose(0, 1, 2, 4, 3, 5)
    patches = patches.reshape(BT, V, L, P2).astype(MM_DTYPE)

    NV = w.shape[0]
    w = w.astype(MM_DTYPE)
    b3 = b.reshape(NV, 1, D).astype(jnp.float32)
    gamma2 = gamma.reshape(1, D).astype(jnp.float32)
    beta2 = beta.reshape(1, D).astype(jnp.float32)

    cap, vmem_limit = _vmem_budget()
    tile_budget = (8 << 20) if cap >= (100 << 20) else (3 << 20)  # v5e/v6e vs v7x
    bt_blk = _pick_divisor(BT, 8)
    # bytes per lt row (per bt): double-buffered bf16 input (lane-padded when P2 < 128),
    # f32 matmul/LN intermediate, double-buffered bf16 output.
    per_row = bt_blk * (4 * max(P2, 128) + 8 * D)
    lt = _pick_divisor(L, max(16, tile_budget // max(1, per_row)), mults=(16, 8, 1))
    grid = (V, BT // bt_blk, L // lt)   # variable axis outermost -> weights stay resident

    in_specs = [
        pl.BlockSpec((bt_blk, 1, lt, P2), lambda v, bt, l, ids: (bt, v, l, 0)),
        pl.BlockSpec((1, P2, D), lambda v, bt, l, ids: (ids[v], 0, 0)),
        pl.BlockSpec((1, 1, D), lambda v, bt, l, ids: (ids[v], 0, 0)),
        pl.BlockSpec((1, D), lambda v, bt, l, ids: (0, 0)),
        pl.BlockSpec((1, D), lambda v, bt, l, ids: (0, 0)),
    ]
    if out_group is None:
        out_shape = jax.ShapeDtypeStruct((BT, V, L, D), out_dtype)
        out_specs = pl.BlockSpec((bt_blk, 1, lt, D),
                                 lambda v, bt, l, ids: (bt, v, l, 0))
    else:
        g0, g1 = out_group
        assert g0 * g1 == V
        out_shape = jax.ShapeDtypeStruct((BT, g0, g1, L, D), out_dtype)
        out_specs = pl.BlockSpec((bt_blk, 1, 1, lt, D),
                                 lambda v, bt, l, ids: (bt, v // g1, v % g1, l, 0))

    return pl.pallas_call(
        _patch_embed_kernel,
        out_shape=out_shape,
        grid_spec=pltpu.PrefetchScalarGridSpec(
            num_scalar_prefetch=1, grid=grid,
            in_specs=in_specs, out_specs=out_specs),
        compiler_params=pltpu.CompilerParams(
            dimension_semantics=("parallel", "parallel", "parallel"),
            vmem_limit_bytes=vmem_limit),
    )(var_ids, patches, w, b3, gamma2, beta2)


# ----------------------------- Pallas kernel 2: attention pooling -----------

def _agg_kernel(*refs, num_x, num_heads, num_tokens, part_sizes, has_epilogue):
    x_refs = refs[:num_x]
    (enc_ref, wl_ref, bl_ref, wv_ref, bv_ref, wo_ref, bo_ref,
     expand_ref) = refs[num_x:num_x + 8]
    rest = refs[num_x + 8:]
    if has_epilogue:
        pos_ref, lead_ref, o_ref = rest
    else:
        (o_ref,) = rest

    H = num_heads
    T = num_tokens
    TH = T * H

    enc = enc_ref[...].astype(jnp.float32)               # (C, 1, D)
    wl = wl_ref[...]                                      # (D, TH) bf16 (LN affine folded)
    bl = bl_ref[...].astype(jnp.float32)                  # (1, TH)
    wv = wv_ref[...]                                      # (D, D)  bf16 (LN affine folded)
    bv = bv_ref[...].astype(jnp.float32)                  # (1, D)
    expand = expand_ref[...]                              # (H, D)  bf16 head-block expansion

    # --- per-part prologue + projections (no concatenated (C, M, D) x copy) ---
    logits_parts, v_parts = [], []
    off = 0
    for r, Cp in zip(x_refs, part_sizes):
        xp = r[...].astype(jnp.float32)
        xp = xp.reshape(Cp, xp.shape[-2], xp.shape[-1])            # (Cp, M, D)
        M, D = xp.shape[1], xp.shape[2]
        xp = xp + enc[off:off + Cp]                                # fused encoding add
        mu = jnp.mean(xp, axis=-1, keepdims=True)
        var = jnp.mean((xp - mu) ** 2, axis=-1, keepdims=True)
        xn = ((xp - mu) * lax.rsqrt(var + EPS)).reshape(Cp * M, D).astype(MM_DTYPE)
        # attention logits for all heads/tokens + value projection: two K=D matmuls
        lg = jnp.dot(xn, wl, preferred_element_type=jnp.float32) + bl     # (Cp*M, TH)
        vp = jnp.dot(xn, wv, preferred_element_type=jnp.float32) + bv     # (Cp*M, D)
        logits_parts.append(lg.reshape(Cp, M, TH))
        v_parts.append(vp.astype(MM_DTYPE).reshape(Cp, M, D))             # hold V in bf16
        off += Cp

    logits = (logits_parts[0] if len(logits_parts) == 1
              else jnp.concatenate(logits_parts, axis=0))                 # (C, M, TH) small

    # softmax over the key axis (C)
    m_ = jnp.max(logits, axis=0, keepdims=True)
    pexp = jnp.exp(logits - m_)
    denom = jnp.sum(pexp, axis=0, keepdims=True)
    pw = (pexp * pl.reciprocal(denom, approx=True)).astype(MM_DTYPE)      # (C, M, TH) bf16

    # --- PV: bf16 head-block expansion matmul + VPU weighted sum, per part ---
    M = v_parts[0].shape[1]
    D = v_parts[0].shape[2]
    outs = []
    for t in range(T):
        acc = jnp.zeros((M, D), jnp.float32)
        off = 0
        for vp, Cp in zip(v_parts, part_sizes):
            p_t = pw[off:off + Cp, :, t * H:(t + 1) * H].reshape(Cp * M, H)
            p_full = jnp.dot(p_t, expand,
                             preferred_element_type=jnp.float32).reshape(Cp, M, D)
            acc = acc + jnp.sum(p_full * vp.astype(jnp.float32), axis=0)  # (M, D)
            off += Cp
        outs.append(acc)

    # batched output projection across tokens: one (T*M, D) @ (D, D) matmul
    o = outs[0] if T == 1 else jnp.concatenate(outs, axis=0)              # (T*M, D)
    o = jnp.dot(o.astype(MM_DTYPE), wo_ref[...], preferred_element_type=jnp.float32)
    o = o + bo_ref[...].astype(jnp.float32)
    if has_epilogue:                                                      # pos/scale/lead adds
        o = o + pos_ref[...].astype(jnp.float32) + lead_ref[0].astype(jnp.float32)
    o_ref[...] = o.reshape(o_ref.shape).astype(o_ref.dtype)


def _fold_agg_params(p, num_heads):
    """Fold learned queries + Q/K projections into one (D, T*heads) logits matrix, and
    fold the pre-LN affine (gamma/beta) into the logits and value projections."""
    D = p['wq'].shape[0]
    T = p['q'].shape[0]
    assert D % num_heads == 0, "embed_dim must be divisible by num_heads"
    dh = D // num_heads
    scale = 1.0 / math.sqrt(dh)
    q_proj = p['q'] @ p['wq'] + p['bq']                                  # (T, D)
    qh = q_proj.reshape(T, num_heads, dh)
    wk_h = p['wk'].reshape(D, num_heads, dh)
    w_logit = jnp.einsum('dhk,thk->dth', wk_h, qh).reshape(D, T * num_heads) * scale
    bk_h = p['bk'].reshape(num_heads, dh)
    b_logit = jnp.einsum('hk,thk->th', bk_h, qh).reshape(1, T * num_heads) * scale
    # LN affine fold: (xn*g + b) @ W + c  ==  xn @ (g[:,None]*W) + (b @ W + c)
    g = p['ln_g'].reshape(D, 1)
    b = p['ln_b'].reshape(1, D)
    w_logit_f = g * w_logit
    b_logit_f = b_logit + b @ w_logit
    wv_f = g * p['wv']
    bv_f = p['bv'] + b @ p['wv']
    return w_logit_f, b_logit_f, wv_f, bv_f


def _head_expand(num_heads, D):
    """expand[h, j] = 1 if j // (D//heads) == h  (bf16, passed as a constant input)."""
    dh = D // num_heads
    col = jnp.arange(D, dtype=jnp.int32) // dh
    row = jnp.arange(num_heads, dtype=jnp.int32)
    return (col[None, :] == row[:, None]).astype(MM_DTYPE)               # (H, D)


def _agg_weight_args(p, num_heads):
    wl, bl, wv, bv = _fold_agg_params(p, num_heads)
    D = p['wo'].shape[0]
    return (wl.astype(MM_DTYPE), bl.astype(jnp.float32),
            wv.astype(MM_DTYPE), bv.astype(jnp.float32),
            p['wo'].astype(MM_DTYPE), p['bo'].astype(jnp.float32),
            _head_expand(num_heads, D))


def _agg_weight_specs(D, TH, H):
    # Constant-index weight blocks: DMA'd once, single-buffered when supported.
    return [_const_spec((D, TH)), _const_spec((1, TH)),
            _const_spec((D, D)), _const_spec((1, D)),
            _const_spec((D, D)), _const_spec((1, D)),
            _const_spec((H, D))]


def _agg_tile(L, C, D, TH, T, vmem_limit):
    """L-tile for kernel 2.  Counts the f32/bf16 live set (x/xn f32, V bf16, logits/pw,
    double-buffered bf16 input, output) that the old ~8 B/elem heuristic ignored."""
    per_row = C * D * 16 + C * TH * 10 + T * D * 8
    budget = max(1 << 20, vmem_limit // 4)       # leave headroom for weights / scratch
    return _pick_divisor(L, max(8, budget // max(1, per_row)), mults=(16, 8, 1))


def level_aggregate(xa, lev_enc, p, num_heads):
    """EncoderAggregationBlock over pressure levels; module transposes folded into BlockSpecs.

    xa: (BT, VA, CA, L, D) -> (BT, VA, T, L, D)
    """
    BT, VA, CA, L, D = xa.shape
    T = p['q'].shape[0]
    TH = T * num_heads
    _, vmem_limit = _vmem_budget()
    lt = _agg_tile(L, CA, D, TH, T, vmem_limit)
    grid = (BT, VA, L // lt)

    in_specs = ([pl.BlockSpec((1, 1, CA, lt, D), lambda bt, va, l: (bt, va, 0, l, 0)),
                 _const_spec((CA, 1, D))]
                + _agg_weight_specs(D, TH, num_heads))
    out_specs = pl.BlockSpec((1, 1, T, lt, D), lambda bt, va, l: (bt, va, 0, l, 0))
    kern = functools.partial(_agg_kernel, num_x=1, num_heads=num_heads,
                             num_tokens=T, part_sizes=(CA,), has_epilogue=False)
    return pl.pallas_call(
        kern,
        out_shape=jax.ShapeDtypeStruct((BT, VA, T, L, D), ACT_DTYPE),
        grid_spec=pltpu.PrefetchScalarGridSpec(
            num_scalar_prefetch=0, grid=grid,
            in_specs=in_specs, out_specs=out_specs),
        compiler_params=pltpu.CompilerParams(
            dimension_semantics=("parallel", "parallel", "parallel"),
            vmem_limit_bytes=vmem_limit),
    )(xa, lev_enc.reshape(CA, 1, D).astype(jnp.float32),
      *_agg_weight_args(p, num_heads))


def variable_aggregate(xs, xa, var_enc, pos_scale, lead_emb, p, num_heads):
    """Final variable aggregation with fused pos/scale/lead-time epilogue.

    xs: (BT, VS, L, D), xa: (BT, VA, hid, L, D) -> (BT, L, D) float32.
    xs/xa are processed per part inside the kernel (no concatenated (C, M, D) copy).
    """
    BT, VS, L, D = xs.shape
    _, VA, hid, _, _ = xa.shape
    T = p['q'].shape[0]
    assert T == 1
    TH = T * num_heads
    C = VS + VA * hid
    _, vmem_limit = _vmem_budget()
    lt = _agg_tile(L, C, D, TH, T, vmem_limit)
    grid = (BT, L // lt)

    in_specs = ([pl.BlockSpec((1, VS, lt, D), lambda bt, l: (bt, 0, l, 0)),
                 pl.BlockSpec((1, VA, hid, lt, D), lambda bt, l: (bt, 0, 0, l, 0)),
                 _const_spec((C, 1, D))]
                + _agg_weight_specs(D, TH, num_heads)
                + [pl.BlockSpec((lt, D), lambda bt, l: (l, 0)),          # pos + scale
                   pl.BlockSpec((1, 1, D), lambda bt, l: (bt, 0, 0))])   # lead-time emb
    out_specs = pl.BlockSpec((1, lt, D), lambda bt, l: (bt, l, 0))
    kern = functools.partial(_agg_kernel, num_x=2, num_heads=num_heads,
                             num_tokens=T, part_sizes=(VS, VA * hid), has_epilogue=True)
    return pl.pallas_call(
        kern,
        out_shape=jax.ShapeDtypeStruct((BT, L, D), jnp.float32),  # final output in f32
        grid_spec=pltpu.PrefetchScalarGridSpec(
            num_scalar_prefetch=0, grid=grid,
            in_specs=in_specs, out_specs=out_specs),
        compiler_params=pltpu.CompilerParams(
            dimension_semantics=("parallel", "parallel"),
            vmem_limit_bytes=vmem_limit),
    )(xs, xa, var_enc.reshape(C, 1, D).astype(jnp.float32),
      *_agg_weight_args(p, num_heads),
      pos_scale.astype(jnp.float32), lead_emb.reshape(BT, 1, D).astype(jnp.float32))


# ----------------------------- parameter init -------------------------------

def init_params(key, num_all_vars, patch_size, embed_dim,
                num_single, num_atmos, num_levels, pressure_encode_dim):
    keys = jax.random.split(key, 8)
    P2 = patch_size * patch_size
    params = {
        'patch_w': 0.02 * jax.random.normal(keys[0], (num_all_vars, P2, embed_dim), jnp.float32),
        'patch_b': 0.02 * jax.random.normal(keys[1], (num_all_vars, embed_dim), jnp.float32),
        'patch_ln_g': jnp.ones((embed_dim,), jnp.float32),
        'patch_ln_b': jnp.zeros((embed_dim,), jnp.float32),
        'lead_w': 0.02 * jax.random.normal(keys[2], (embed_dim,), jnp.float32),
        'lead_b': jnp.zeros((embed_dim,), jnp.float32),
        'single_var_encode': get_1d_pos_encode(embed_dim, jnp.arange(num_single)),
        'atmos_var_encode': get_1d_pos_encode(embed_dim, jnp.arange(num_atmos)),
        'atmos_lev_encode': get_1d_pos_encode(embed_dim, jnp.arange(num_levels)),
    }

    def agg_params(k, num_out):
        ks = jax.random.split(k, 5)
        d = embed_dim
        return {
            'q': 0.02 * jax.random.normal(ks[0], (num_out, d), jnp.float32),
            'wq': 0.02 * jax.random.normal(ks[1], (d, d), jnp.float32),
            'wk': 0.02 * jax.random.normal(ks[2], (d, d), jnp.float32),
            'wv': 0.02 * jax.random.normal(ks[3], (d, d), jnp.float32),
            'wo': 0.02 * jax.random.normal(ks[4], (d, d), jnp.float32),
            'bq': jnp.zeros((1, d), jnp.float32), 'bk': jnp.zeros((1, d), jnp.float32),
            'bv': jnp.zeros((1, d), jnp.float32), 'bo': jnp.zeros((1, d), jnp.float32),
            'ln_g': jnp.ones((1, d), jnp.float32), 'ln_b': jnp.zeros((1, d), jnp.float32),
        }

    params['level_agg'] = agg_params(keys[3], pressure_encode_dim)
    params['variable_agg'] = agg_params(keys[4], 1)
    return params


# ----------------------------- forward ---------------------------------------

def multiscale_encoder_forward(params, x_single, x_atmos, lead_times, lat, lon,
                               *, patch_size, embed_dim, num_heads):
    B, T, VS, H, W = x_single.shape
    _, _, VA, CA, _, _ = x_atmos.shape
    BT = B * T
    D = embed_dim
    assert D % num_heads == 0, "embed_dim must be divisible by num_heads"

    x_single = x_single.reshape(BT, VS, H, W)
    x_atmos = x_atmos.reshape(BT, VA * CA, H, W)

    # metadata vars == module vars in this synthetic setting -> ids are arange
    single_ids = jnp.arange(VS, dtype=jnp.int32)
    atmos_ids = jnp.arange(VS, VS + VA * CA, dtype=jnp.int32)

    # per-variable patch embedding (Pallas kernel 1); atmos output is written
    # directly as (BT, VA, CA, L, D) so no later slice / unflatten pass is needed.
    xs = grouped_patch_embed(x_single, single_ids, params['patch_w'], params['patch_b'],
                             params['patch_ln_g'], params['patch_ln_b'],
                             patch_size, D)                                # (BT, VS, L, D)
    xa = grouped_patch_embed(x_atmos, atmos_ids, params['patch_w'], params['patch_b'],
                             params['patch_ln_g'], params['patch_ln_b'],
                             patch_size, D, out_group=(VA, CA))            # (BT, VA, CA, L, D)

    # pressure-level aggregation (Pallas kernel 2); level encodings added in-kernel
    # before the pre-LayerNorm (identical math), transposes folded into BlockSpecs.
    hid = params['level_agg']['q'].shape[0]
    xa = level_aggregate(xa, params['atmos_lev_encode'][:CA],
                         params['level_agg'], num_heads)                   # (BT, VA, hid, L, D)

    # variable aggregation (Pallas kernel 2); single/atmos variable encodings added
    # in-kernel, pos/scale/lead-time adds fused into the output epilogue.
    var_enc = jnp.concatenate(
        [params['single_var_encode'][:VS],
         jnp.repeat(params['atmos_var_encode'][:VA], hid, axis=0)], axis=0)

    pos_enc, scale_enc = get_2d_patched_lat_lon_encode(D, lat, lon, patch_size)
    pos_scale = pos_enc + scale_enc                                        # (L, D)
    lt_ = lead_times.astype(jnp.float32)
    lead_emb = lt_[:, None] * params['lead_w'][None, :] + params['lead_b'][None, :]
    lead_emb = jnp.repeat(lead_emb, T, axis=0)                             # (BT, D)

    x = variable_aggregate(xs, xa, var_enc, pos_scale, lead_emb,
                           params['variable_agg'], num_heads)              # (BT, L, D) f32

    # TODO(synk): pos_drop (nn.Dropout p=0.1) is identity in eval mode; not applied.
    # NOTE: for lane-dense stores keep embed_dim a multiple of 128 (demo uses 128).
    return x


# ----------------------------- main ------------------------------------------

if __name__ == "__main__":
    B, T, VS, VA, CA, H, W = 2, 1, 2, 2, 3, 16, 16
    patch_size, embed_dim, num_heads, pressure_encode_dim = 4, 128, 4, 1

    key = jax.random.PRNGKey(0)
    k1, k2, kp = jax.random.split(key, 3)
    x_single = jax.random.normal(k1, (B, T, VS, H, W), jnp.float32)
    x_atmos = jax.random.normal(k2, (B, T, VA, CA, H, W), jnp.float32)
    lead_times = jnp.arange(B, dtype=jnp.float32) + 1.0
    lat = jnp.linspace(-80.0, 80.0, H, dtype=jnp.float32)
    lon = jnp.linspace(0.0, 350.0, W, dtype=jnp.float32)

    params = init_params(kp, VS + VA * CA, patch_size, embed_dim,
                         VS, VA, CA, pressure_encode_dim)

    out = multiscale_encoder_forward(params, x_single, x_atmos, lead_times, lat, lon,
                                     patch_size=patch_size, embed_dim=embed_dim,
                                     num_heads=num_heads)
    out = jax.block_until_ready(out)
    L = (H // patch_size) * (W // patch_size)
    assert out.shape == (B * T, L, embed_dim), out.shape
    assert bool(jnp.all(jnp.isfinite(out)))
    print("KERNEL_OK")
</pallas_src>

<mosaic_0001>
module attributes {stable_mosaic.version = 11 : i64} {
  func.func @_patch_embed_kernel(%arg0: i32, %arg1: i32, %arg2: i32, %arg3: memref<2xi32, #tpu.memory_space<smem>>, %arg4: memref<2x1x16x16xbf16, #tpu.memory_space<vmem>>, %arg5: memref<1x16x128xbf16, #tpu.memory_space<vmem>>, %arg6: memref<1x1x128xf32, #tpu.memory_space<vmem>>, %arg7: memref<1x128xf32, #tpu.memory_space<vmem>>, %arg8: memref<1x128xf32, #tpu.memory_space<vmem>>, %arg9: memref<2x1x16x128xbf16, #tpu.memory_space<vmem>>) attributes {dimension_semantics = [#tpu.dimension_semantics<parallel>, #tpu.dimension_semantics<parallel>, #tpu.dimension_semantics<parallel>], iteration_bounds = array<i64: 2, 1, 1>, scalar_prefetch = 1 : i64, scratch_operands = 0 : i64, tpu.core_type = #tpu.core_type<tc>, window_params = [{transform_indices = @transform_0, window_bounds = array<i64: 2, 1, 16, 16>}, {transform_indices = @transform_1, window_bounds = array<i64: 1, 16, 128>}, {transform_indices = @transform_2, window_bounds = array<i64: 1, 1, 128>}, {pipeline_mode = #tpu.pipeline_mode<synchronous>, transform_indices = @transform_3, window_bounds = array<i64: 1, 128>}, {pipeline_mode = #tpu.pipeline_mode<synchronous>, transform_indices = @transform_4, window_bounds = array<i64: 1, 128>}, {transform_indices = @transform_5, window_bounds = array<i64: 2, 1, 16, 128>}]} {
    %c0 = arith.constant 0 : index
    %c0_0 = arith.constant 0 : index
    %c0_1 = arith.constant 0 : index
    %c0_2 = arith.constant 0 : index
    %0 = vector.load %arg4[%c0, %c0_0, %c0_1, %c0_2] : memref<2x1x16x16xbf16, #tpu.memory_space<vmem>>, vector<2x1x16x16xbf16>
    %1 = vector.shape_cast %0 : vector<2x1x16x16xbf16> to vector<32x16xbf16>
    %c0_3 = arith.constant 0 : index
    %c0_4 = arith.constant 0 : index
    %c0_5 = arith.constant 0 : index
    %2 = vector.load %arg5[%c0_3, %c0_4, %c0_5] : memref<1x16x128xbf16, #tpu.memory_space<vmem>>, vector<1x16x128xbf16>
    %3 = vector.shape_cast %2 : vector<1x16x128xbf16> to vector<16x128xbf16>
    %cst = arith.constant dense<0.000000e+00> : vector<32x128xf32>
    %4 = tpu.matmul %1, %3, %cst {dimension_numbers = #tpu.dot_dimension_numbers<[1], [0], [0], [1], [0, 0, 1, 1], [], []>} : vector<32x16xbf16>, vector<16x128xbf16>, vector<32x128xf32> -> vector<32x128xf32>
    %c0_6 = arith.constant 0 : index
    %c0_7 = arith.constant 0 : index
    %c0_8 = arith.constant 0 : index
    %5 = vector.load %arg6[%c0_6, %c0_7, %c0_8] : memref<1x1x128xf32, #tpu.memory_space<vmem>>, vector<1x1x128xf32>
    %6 = vector.shape_cast %5 : vector<1x1x128xf32> to vector<1x128xf32>
    %7 = vector.broadcast %6 : vector<1x128xf32> to vector<32x128xf32>
    %8 = arith.addf %4, %7 : vector<32x128xf32>
    %cst_9 = arith.constant dense<0.000000e+00> : vector<32xf32>
    %9 = vector.multi_reduction <add>, %8, %cst_9 [1] : vector<32x128xf32> to vector<32xf32>
    %10 = vector.shape_cast %9 : vector<32xf32> to vector<32x1xf32>
    %cst_10 = arith.constant 1.280000e+02 : f32
    %11 = vector.broadcast %cst_10 : f32 to vector<32x1xf32>
    %12 = arith.divf %10, %11 : vector<32x1xf32>
    %13 = vector.broadcast %12 : vector<32x1xf32> to vector<32x128xf32>
    %14 = arith.subf %8, %13 : vector<32x128xf32>
    %15 = arith.mulf %14, %14 : vector<32x128xf32>
    %cst_11 = arith.constant dense<0.000000e+00> : vector<32xf32>
    %16 = vector.multi_reduction <add>, %15, %cst_11 [1] : vector<32x128xf32> to vector<32xf32>
    %17 = vector.shape_cast %16 : vector<32xf32> to vector<32x1xf32>
    %cst_12 = arith.constant 1.280000e+02 : f32
    %18 = vector.broadcast %cst_12 : f32 to vector<32x1xf32>
    %19 = arith.divf %17, %18 : vector<32x1xf32>
    %20 = vector.broadcast %12 : vector<32x1xf32> to vector<32x128xf32>
    %21 = arith.subf %8, %20 : vector<32x128xf32>
    %cst_13 = arith.constant 9.99999974E-6 : f32
    %22 = vector.broadcast %cst_13 : f32 to vector<32x1xf32>
    %23 = arith.addf %19, %22 : vector<32x1xf32>
    %24 = math.rsqrt %23 : vector<32x1xf32>
    %25 = vector.broadcast %24 : vector<32x1xf32> to vector<32x128xf32>
    %26 = arith.mulf %21, %25 : vector<32x128xf32>
    %c0_14 = arith.constant 0 : index
    %c0_15 = arith.constant 0 : index
    %27 = vector.load %arg7[%c0_14, %c0_15] : memref<1x128xf32, #tpu.memory_space<vmem>>, vector<1x128xf32>
    %28 = vector.broadcast %27 : vector<1x128xf32> to vector<32x128xf32>
    %29 = arith.mulf %26, %28 : vector<32x128xf32>
    %c0_16 = arith.constant 0 : index
    %c0_17 = arith.constant 0 : index
    %30 = vector.load %arg8[%c0_16, %c0_17] : memref<1x128xf32, #tpu.memory_space<vmem>>, vector<1x128xf32>
    %31 = vector.broadcast %30 : vector<1x128xf32> to vector<32x128xf32>
    %32 = arith.addf %29, %31 : vector<32x128xf32>
    %33 = vector.shape_cast %32 : vector<32x128xf32> to vector<2x1x16x128xf32>
    %34 = arith.truncf %33 : vector<2x1x16x128xf32> to vector<2x1x16x128xbf16>
    %c0_18 = arith.constant 0 : index
    %c0_19 = arith.constant 0 : index
    %c0_20 = arith.constant 0 : index
    %c0_21 = arith.constant 0 : index
    %35 = vector.load %arg9[%c0_18, %c0_19, %c0_20, %c0_21] : memref<2x1x16x128xbf16, #tpu.memory_space<vmem>>, vector<2x1x16x128xbf16>
    tpu.vector_store %arg9[%c0_18, %c0_19, %c0_20, %c0_21], %34 {strides = array<i32>} : memref<2x1x16x128xbf16, #tpu.memory_space<vmem>>, vector<2x1x16x128xbf16>,
    return
  }
  func.func @transform_0(%arg0: i32, %arg1: i32, %arg2: i32, %arg3: memref<2xi32, #tpu.memory_space<smem>>) -> (i32, i32, i32, i32) {
    %c0_i32 = arith.constant 0 : i32
    %c0_i32_0 = arith.constant 0 : i32
    return %arg1, %arg0, %arg2, %c0_i32 : i32, i32, i32, i32
  }
  func.func @transform_1(%arg0: i32, %arg1: i32, %arg2: i32, %arg3: memref<2xi32, #tpu.memory_space<smem>>) -> (i32, i32, i32) {
    %0 = arith.index_cast %arg0 : i32 to index
    %1 = memref.load %arg3[%0] : memref<2xi32, #tpu.memory_space<smem>>
    %c0_i32 = arith.constant 0 : i32
    %c0_i32_0 = arith.constant 0 : i32
    %c0_i32_1 = arith.constant 0 : i32
    return %1, %c0_i32, %c0_i32_0 : i32, i32, i32
  }
  func.func @transform_2(%arg0: i32, %arg1: i32, %arg2: i32, %arg3: memref<2xi32, #tpu.memory_space<smem>>) -> (i32, i32, i32) {
    %0 = arith.index_cast %arg0 : i32 to index
    %1 = memref.load %arg3[%0] : memref<2xi32, #tpu.memory_space<smem>>
    %c0_i32 = arith.constant 0 : i32
    %c0_i32_0 = arith.constant 0 : i32
    %c0_i32_1 = arith.constant 0 : i32
    return %1, %c0_i32, %c0_i32_0 : i32, i32, i32
  }
  func.func @transform_3(%arg0: i32, %arg1: i32, %arg2: i32, %arg3: memref<2xi32, #tpu.memory_space<smem>>) -> (i32, i32) {
    %c0_i32 = arith.constant 0 : i32
    %c0_i32_0 = arith.constant 0 : i32
    %c0_i32_1 = arith.constant 0 : i32
    return %c0_i32, %c0_i32_0 : i32, i32
  }
  func.func @transform_4(%arg0: i32, %arg1: i32, %arg2: i32, %arg3: memref<2xi32, #tpu.memory_space<smem>>) -> (i32, i32) {
    %c0_i32 = arith.constant 0 : i32
    %c0_i32_0 = arith.constant 0 : i32
    %c0_i32_1 = arith.constant 0 : i32
    return %c0_i32, %c0_i32_0 : i32, i32
  }
  func.func @transform_5(%arg0: i32, %arg1: i32, %arg2: i32, %arg3: memref<2xi32, #tpu.memory_space<smem>>) -> (i32, i32, i32, i32) {
    %c0_i32 = arith.constant 0 : i32
    %c0_i32_0 = arith.constant 0 : i32
    return %arg1, %arg0, %arg2, %c0_i32 : i32, i32, i32, i32
  }
}

</mosaic_0001>

<llo_original>
// kernel: tpu_custom_call.1
$region0: #{tpu_custom_call.1}
  #allocation0 [shape = 'u32[]', space=smem, size = 0x4, offset = 0x4, fixed_abs, tag = 'smem constant byte address 0x4 - core index']
  #allocation1 [shape = 'u32[144,128]{1,0:T(1,128)}', space=vmem, size = 0x12000, scoped, tag = 'internal scratch']
  #allocation2 [shape = 's32[1]{0}', space=sflag, size = 0x4, scoped, tag = 'scoped memory for tpu_custom_call.1']
  #allocation3 [shape = 'u8[512]{0}', space=smem, size = 0x200, scoped, tag = 'prefetched SMEM operand 0']
  #allocation11 [shape = 's32[]', space=sflag, size = 0x4, offset = 0, fixed_abs, tag = 'sflag constant byte address 0x0 - dummy sync flag']
  #allocation13 [shape = 's32[]', space=sflag, size = 0x4, offset = 0, fixed_abs, tag = 'sflag constant byte address 0x0 - dummy sync flag']
  %s0 = inlined_call_operand.hbm [shape: s32[2], index: 0, kind: input, shape index: {}]
  %s1 = inlined_call_operand.hbm [shape: bf16[2,2,16,16], index: 1, kind: input, shape index: {}]
  %s2 = inlined_call_operand.hbm [shape: bf16[8,16,128], index: 2, kind: input, shape index: {}]
  %s3 = inlined_call_operand.hbm [shape: f32[8,1,128], index: 3, kind: input, shape index: {}]
  %s4 = inlined_call_operand.vmem [shape: f32[1,128], index: 4, kind: input, shape index: {}]
  %s5 = inlined_call_operand.vmem [shape: f32[1,128], index: 5, kind: input, shape index: {}]
  %s6 = inlined_call_operand.hbm [shape: bf16[2,2,16,128], index: 6, kind: output, shape index: {}]
  %s7 = sld [smem:[#allocation0]]
  $region65: #{tpu_custom_call.1} parent=0
    _
  %s9 = ssub.s32 1, %s7
  %s10 = scalar_select 0, %s9, %s7
  %12 = dma.hbm_to_smem %s0, 16, [#allocation3], [#allocation2]
  %13 = dma.done [#allocation2], 16
  %14 = sfence
  $region1: #{tpu_custom_call.1} parent=0
    #allocation4 [shape = 'u8[16384]{0}', space=vmem, size = 0x4000, scoped, tag = 'input window, operand 1']
    #allocation5 [shape = 's32[2]{0}', space=sflag, size = 0x8, scoped, tag = 'scoped memory for tpu_custom_call.1']
    #allocation6 [shape = 's32[2]{0}', space=sflag, size = 0x8, scoped, tag = 'scoped memory for tpu_custom_call.1']
    #allocation7 [shape = 'u8[8192]{0}', space=vmem, size = 0x2000, scoped, tag = 'input window, operand 2']
    #allocation8 [shape = 's32[2]{0}', space=sflag, size = 0x8, scoped, tag = 'scoped memory for tpu_custom_call.1']
    #allocation9 [shape = 'u8[1024]{0}', space=vmem, size = 0x400, scoped, tag = 'input window, operand 3']
    #allocation10 [shape = 'u8[16384]{0}', space=vmem, size = 0x4000, scoped, tag = 'output window, operand 0']
    %15 = vsyncpa [#allocation5], 0
    %s16 = scalar_lea.sflag [#allocation5], 1
    %17 = vsyncpa %s16, 0
    %18 = vsyncpa [#allocation8], 0
    %s19 = scalar_lea.sflag [#allocation8], 1
    %20 = vsyncpa %s19, 0
    %21 = vsyncpa [#allocation6], 0
    %s22 = scalar_lea.sflag [#allocation6], 1
    %23 = vsyncpa %s22, 0
    loop: start=0, step=1, limit=4
    $region2: #{tpu_custom_call.1} parent=1 // loop_pre_header
      _
    $region3: #{tpu_custom_call.1} parent=1 // loop_header
      %s25 = sphi 0, %s29
      %p26 = scmp.ge.s32.totalorder %s25, 4
      %s32 = sphi 0, %s51
      %s33 = sphi 0, %s47
      %s34 = sphi 0, %s43
      %s35 = sphi 0, %s32
      %s36 = sphi 0, %s33
      %s37 = sphi 0, %s34
      %s38 = sphi 0, %s35
      %s39 = sphi 0, %s36
      %s40 = sphi 0, %s37
      %s58 = sphi 0, %s60
      %s61 = sphi 0, %s58
      %s62 = sphi 0, %s61
      %s78 = sphi 0, %s62
      %s86 = sphi 0, %s88
      %s89 = sphi 0, %s86
      %s90 = sphi 0, %s89
      %s106 = sphi 0, %s90
      %s114 = sphi 0, %s116
      %s117 = sphi 0, %s114
      %s118 = sphi 0, %s117
      %s134 = sphi 0, %s118
      %s138 = sphi 0, %s138
      %s140 = sphi 0, %s138
      %s141 = sphi 0, %s140
      %s155 = sphi 0, %s141
      %s159 = sphi 0, %s159
      %s161 = sphi 0, %s159
      %s162 = sphi 0, %s161
      %s176 = sphi 0, %s162
      %s186 = sphi 0, %s188
      %s189 = sphi 0, %s186
      %s190 = sphi 0, %s189
      %s206 = sphi 0, %s190
    $region4: #{tpu_custom_call.1} parent=1 // loop_header_branch
      %28 = sbr.rel (%p26) target = $region8
    $region5: #{tpu_custom_call.1} parent=1 // loop_body
      %s30 = ssub.s32 %s25, 1
      %s31 = ssub.s32 %s25, 2
      %s41 = sadd.s32 1, %s34
      %p42 = scmp.ge.s32.totalorder %s41, 1
      %s43 = scalar_select %p42, 0, %s41
      %s44 = sadd.s32 1, %s33
      %s45 = scalar_select %p42, %s44, %s33
      %p46 = scmp.ge.s32.totalorder %s45, 1
      %s47 = scalar_select %p46, 0, %s45
      %s48 = sadd.s32 1, %s32
      %s49 = scalar_select %p46, %s48, %s32
      %p50 = scmp.ge.s32.totalorder %s49, 2
      %s51 = scalar_select %p50, 0, %s49
      %s52 = ssub.s32 %s33, %s47
      %s53 = ssub.s32 %s32, %s51
      %s54 = sor.u32 %s52, %s53
      %s55 = ssub.s32 %s34, %s43
      %s56 = sor.u32 %s54, %s55
      %p57 = scmp.eq.s32.totalorder %s56, 0
      %s59 = sadd.s32 %s58, 1
      %s60 = scalar_select %p57, %s58, %s59
      %p63 = pneg %p57
      %p64 = scmp.eq.s32.totalorder %s25, 1
      %p65 = por %p63, %p64
      %p66 = scmp.ne.s32.totalorder %s58, %s61
      %p67 = scmp.eq.s32.totalorder %s25, 0
      %p68 = por %p66, %p67
      %p69 = scmp.ne.s32.totalorder %s58, %s61
      %p70 = scmp.eq.s32.totalorder %s30, 1
      %p71 = por %p69, %p70
      %p72 = scmp.ne.s32.totalorder %s61, %s62
      %p73 = scmp.eq.s32.totalorder %s30, 0
      %p74 = por %p72, %p73
      %p75 = scmp.ne.s32.totalorder %s61, %s62
      %p76 = scmp.eq.s32.totalorder %s31, 1
      %p77 = por %p75, %p76
      %p79 = scmp.ne.s32.totalorder %s62, %s78
      %p80 = scmp.eq.s32.totalorder %s31, 0
      %p81 = por %p79, %p80
      %s82 = sld [smem:[#allocation3 + %s32]]
      %s83 = sld [smem:[#allocation3 + %s51]]
      %s84 = ssub.s32 %s82, %s83
      %p85 = scmp.eq.s32.totalorder %s84, 0
      %s87 = sadd.s32 %s86, 1
      %s88 = scalar_select %p85, %s86, %s87
      %p91 = pneg %p85
      %p92 = scmp.eq.s32.totalorder %s25, 1
      %p93 = por %p91, %p92
      %p94 = scmp.ne.s32.totalorder %s86, %s89
      %p95 = scmp.eq.s32.totalorder %s25, 0
      %p96 = por %p94, %p95
      %p97 = scmp.ne.s32.totalorder %s86, %s89
      %p98 = scmp.eq.s32.totalorder %s30, 1
      %p99 = por %p97, %p98
      %p100 = scmp.ne.s32.totalorder %s89, %s90
      %p101 = scmp.eq.s32.totalorder %s30, 0
      %p102 = por %p100, %p101
      %p103 = scmp.ne.s32.totalorder %s89, %s90
      %p104 = scmp.eq.s32.totalorder %s31, 1
      %p105 = por %p103, %p104
      %p107 = scmp.ne.s32.totalorder %s90, %s106
      %p108 = scmp.eq.s32.totalorder %s31, 0
      %p109 = por %p107, %p108
      %s110 = sld [smem:[#allocation3 + %s32]]
      %s111 = sld [smem:[#allocation3 + %s51]]
      %s112 = ssub.s32 %s110, %s111
      %p113 = scmp.eq.s32.totalorder %s112, 0
      %s115 = sadd.s32 %s114, 1
      %s116 = scalar_select %p113, %s114, %s115
      %p119 = pneg %p113
      %p120 = scmp.eq.s32.totalorder %s25, 1
      %p121 = por %p119, %p120
      %p122 = scmp.ne.s32.totalorder %s114, %s117
      %p123 = scmp.eq.s32.totalorder %s25, 0
      %p124 = por %p122, %p123
      %p125 = scmp.ne.s32.totalorder %s114, %s117
      %p126 = scmp.eq.s32.totalorder %s30, 1
      %p127 = por %p125, %p126
      %p128 = scmp.ne.s32.totalorder %s117, %s118
      %p129 = scmp.eq.s32.totalorder %s30, 0
      %p130 = por %p128, %p129
      %p131 = scmp.ne.s32.totalorder %s117, %s118
      %p132 = scmp.eq.s32.totalorder %s31, 1
      %p133 = por %p131, %p132
      %p135 = scmp.ne.s32.totalorder %s118, %s134
      %p136 = scmp.eq.s32.totalorder %s31, 0
      %p137 = por %p135, %p136
      %s139 = sadd.s32 %s138, 1
      %p142 = scmp.eq.s32.totalorder %s25, 1
      %p143 = scmp.ne.s32.totalorder %s138, %s140
      %p144 = scmp.eq.s32.totalorder %s25, 0
      %p145 = por %p143, %p144
      %p146 = scmp.ne.s32.totalorder %s138, %s140
      %p147 = scmp.eq.s32.totalorder %s30, 1
      %p148 = por %p146, %p147
      %p149 = scmp.ne.s32.totalorder %s140, %s141
      %p150 = scmp.eq.s32.totalorder %s30, 0
      %p151 = por %p149, %p150
      %p152 = scmp.ne.s32.totalorder %s140, %s141
      %p153 = scmp.eq.s32.totalorder %s31, 1
      %p154 = por %p152, %p153
      %p156 = scmp.ne.s32.totalorder %s141, %s155
      %p157 = scmp.eq.s32.totalorder %s31, 0
      %p158 = por %p156, %p157
      %s160 = sadd.s32 %s159, 1
      %p163 = scmp.eq.s32.totalorder %s25, 1
      %p164 = scmp.ne.s32.totalorder %s159, %s161
      %p165 = scmp.eq.s32.totalorder %s25, 0
      %p166 = por %p164, %p165
      %p167 = scmp.ne.s32.totalorder %s159, %s161
      %p168 = scmp.eq.s32.totalorder %s30, 1
      %p169 = por %p167, %p168
      %p170 = scmp.ne.s32.totalorder %s161, %s162
      %p171 = scmp.eq.s32.totalorder %s30, 0
      %p172 = por %p170, %p171
      %p173 = scmp.ne.s32.totalorder %s161, %s162
      %p174 = scmp.eq.s32.totalorder %s31, 1
      %p175 = por %p173, %p174
      %p177 = scmp.ne.s32.totalorder %s162, %s176
      %p178 = scmp.eq.s32.totalorder %s31, 0
      %p179 = por %p177, %p178
      %s180 = ssub.s32 %s33, %s47
      %s181 = ssub.s32 %s32, %s51
      %s182 = sor.u32 %s180, %s181
      %s183 = ssub.s32 %s34, %s43
      %s184 = sor.u32 %s182, %s183
      %p185 = scmp.eq.s32.totalorder %s184, 0
      %s187 = sadd.s32 %s186, 1
      %s188 = scalar_select %p185, %s186, %s187
      %p191 = pneg %p185
      %p192 = scmp.eq.s32.totalorder %s25, 1
      %p193 = por %p191, %p192
      %p194 = scmp.ne.s32.totalorder %s186, %s189
      %p195 = scmp.eq.s32.totalorder %s25, 0
      %p196 = por %p194, %p195
      %p197 = scmp.ne.s32.totalorder %s186, %s189
      %p198 = scmp.eq.s32.totalorder %s30, 1
      %p199 = por %p197, %p198
      %p200 = scmp.ne.s32.totalorder %s189, %s190
      %p201 = scmp.eq.s32.totalorder %s30, 0
      %p202 = por %p200, %p201
      %p203 = scmp.ne.s32.totalorder %s189, %s190
      %p204 = scmp.eq.s32.totalorder %s31, 1
      %p205 = por %p203, %p204
      %p207 = scmp.ne.s32.totalorder %s190, %s206
      %p208 = scmp.eq.s32.totalorder %s31, 0
      %p209 = por %p207, %p208
      %p210 = scmp.le.s32.totalorder 1, %s25
      %p211 = scmp.lt.s32.totalorder %s25, 3
      %p212 = pnand %p210, %p211
      %p213 = pneg %p212
      // Predicated region
      $region9: #{tpu_custom_call.1} parent=5 // pred_check
        _
      $region10: #{tpu_custom_call.1} parent=5 // pred_check_branch
        %215 = sbr.rel (%p212) target = $region12
      $region11: #{tpu_custom_call.1} parent=5 // pred_region
        %s216 = ssub.s32 %s25, 1
        // Predicated region
        $region13: #{tpu_custom_call.1} parent=11 // pred_check
          %p217 = pneg %p151
        $region14: #{tpu_custom_call.1} parent=11 // pred_check_branch
          %219 = sbr.rel (%p217) target = $region16
        $region15: #{tpu_custom_call.1} parent=11 // pred_region
          _
        $region16: #{tpu_custom_call.1} parent=11 // pred_fallthru
          _
        // Predicated region
        $region17: #{tpu_custom_call.1} parent=11 // pred_check
          %p220 = pneg %p172
        $region18: #{tpu_custom_call.1} parent=11 // pred_check_branch
          %222 = sbr.rel (%p220) target = $region20
        $region19: #{tpu_custom_call.1} parent=11 // pred_region
          _
        $region20: #{tpu_custom_call.1} parent=11 // pred_fallthru
          _
      $region12: #{tpu_custom_call.1} parent=5 // pred_fallthru
        _
      %p223 = scmp.lt.s32.totalorder %s25, 2
      // Predicated region
      $region21: #{tpu_custom_call.1} parent=5 // pred_check
        %p224 = pneg %p223
      $region22: #{tpu_custom_call.1} parent=5 // pred_check_branch
        %226 = sbr.rel (%p224) target = $region24
      $region23: #{tpu_custom_call.1} parent=5 // pred_region
        // Predicated region
        $region25: #{tpu_custom_call.1} parent=23 // pred_check
          %p227 = pneg %p68
        $region26: #{tpu_custom_call.1} parent=23 // pred_check_branch
          %229 = sbr.rel (%p227) target = $region28
        $region27: #{tpu_custom_call.1} parent=23 // pred_region
          #allocation12 [shape = 'u32[6]{0}', space=smem, size = 0x18, scoped, tag = 'DMA stride descriptor']
          %s230 = sand.u32 %s58, 1
          %s231 = scalar_lea.sflag [#allocation5], %s230
          %s232 = sand.u32 %s58, 1
          %s233 = smul.addr %s232, 16
          %s234 = scalar_lea.vmem [#allocation4], %s233
          %s235 = smul.u32 2, %s33
          %s236 = smul.u32 2, %s34
          %s238 = ssub.s32 256, 256
          %239 = vsyncadd %s231, %s238
          %s240 = smul.addr %s32, 2
          %s241 = sadd.s32 %s236, %s240
          %s242 = smul.addr %s235, 4
          %s243 = sadd.s32 %s241, %s242
          %s244 = smul.addr %s243, 64
          %s245 = scalar_lea.hbm %s1, %s244
          %s247 = sshll.u32 1, 14
          %s248 = sxor.u32 4294967295, %s247
          %s250 = sld [smem:[#allocation0]]
          %s251 = sadd.s32 2, %s250
          %s253 = sshll.u32 7, 26
          %s254 = sxor.u32 4294967295, %s253
          %s255 = sand.u32 0, %s254
          %s256 = sshll.u32 %s251, 26
          %s257 = sor.u32 %s255, %s256
          %s258 = sshll.u32 %s234, 4
          %s259 = int_to_ptr.vmem [resolvable:$true] %s258
          %265 = sst [smem:[#allocation12]] 256
          %s266 = scalar_lea.smem [#allocation12], 1
          %267 = sst [smem:[%s266]] 128
          %s268 = scalar_lea.smem [#allocation12], 2
          %269 = sst [smem:[%s268]] 2
          %s270 = scalar_lea.smem [#allocation12], 3
          %271 = sst [smem:[%s270]] 64
          %s272 = scalar_lea.smem [#allocation12], 4
          %273 = sst [smem:[%s272]] 64
          %s274 = scalar_lea.smem [#allocation12], 5
          %275 = sst [smem:[%s274]] 4
          %277 = dma.general %s245, 256, %s259, %s231, 131072, [#allocation12], %s257, 0
        $region28: #{tpu_custom_call.1} parent=23 // pred_fallthru
          _
        // Predicated region
        $region29: #{tpu_custom_call.1} parent=23 // pred_check
          %p278 = pneg %p96
        $region30: #{tpu_custom_call.1} parent=23 // pred_check_branch
          %280 = sbr.rel (%p278) target = $region32
        $region31: #{tpu_custom_call.1} parent=23 // pred_region
          %s281 = sand.u32 %s25, 1
          %s282 = scalar_lea.sflag [#allocation8], %s281
          %s283 = sand.u32 %s86, 1
          %s284 = smul.addr %s283, 8
          %s285 = scalar_lea.vmem [#allocation7], %s284
          %s286 = sld [smem:[#allocation3 + %s32]]
          %s288 = ssub.s32 128, 128
          %289 = vsyncadd %s282, %s288
          %s290 = smul.addr %s286, 2
          %s291 = smul.addr %s290, 64
          %s292 = scalar_lea.hbm %s2, %s291
          %s293 = sshll.u32 %s285, 4
          %s294 = int_to_ptr.vmem [resolvable:$true] %s293
          %299 = dma.hbm_to_vmem [thread:$0]  %s292, 128, %s294, %s282, 64, 64, 4
        $region32: #{tpu_custom_call.1} parent=23 // pred_fallthru
          _
        // Predicated region
        $region33: #{tpu_custom_call.1} parent=23 // pred_check
          %p300 = pneg %p124
        $region34: #{tpu_custom_call.1} parent=23 // pred_check_branch
          %302 = sbr.rel (%p300) target = $region36
        $region35: #{tpu_custom_call.1} parent=23 // pred_region
          %s303 = sand.u32 %s25, 1
          %s304 = scalar_lea.sflag [#allocation8], %s303
          %s305 = sand.u32 %s114, 1
          %s306 = scalar_lea.vmem [#allocation9], %s305
          %s307 = sld [smem:[#allocation3 + %s32]]
          %s309 = ssub.s32 16, 16
          %310 = vsyncadd %s304, %s309
          %s311 = smul.addr %s307, 16
          %s312 = scalar_lea.hbm %s3, %s311
          %s314 = sshll.u32 %s306, 4
          %s315 = int_to_ptr.vmem [resolvable:$true] %s314
          %317 = dma.hbm_to_vmem [thread:$0]  %s312, 16, %s315, %s304
        $region36: #{tpu_custom_call.1} parent=23 // pred_fallthru
          _
      $region24: #{tpu_custom_call.1} parent=5 // pred_fallthru
        _
      %p318 = scmp.le.s32.totalorder 1, %s25
      %p319 = scmp.lt.s32.totalorder %s25, 3
      %p320 = pnand %p318, %p319
      %p321 = pneg %p320
      // Predicated region
      $region37: #{tpu_custom_call.1} parent=5 // pred_check
        _
      $region38: #{tpu_custom_call.1} parent=5 // pred_check_branch
        %323 = sbr.rel (%p320) target = $region40
      $region39: #{tpu_custom_call.1} parent=5 // pred_region
        %s324 = ssub.s32 %s25, 1
        %s325 = sand.u32 %s61, 1
        %s326 = scalar_lea.sflag [#allocation5], %s325
        %s327 = sand.u32 %s61, 1
        %s328 = smul.addr %s327, 16
        %s329 = scalar_lea.vmem [#allocation4], %s328
        // Predicated region
        $region41: #{tpu_custom_call.1} parent=39 // pred_check
          %p330 = pneg %p74
        $region42: #{tpu_custom_call.1} parent=39 // pred_check_branch
          %332 = sbr.rel (%p330) target = $region44
        $region43: #{tpu_custom_call.1} parent=39 // pred_region
          %333 = dma.done %s326, 256
        $region44: #{tpu_custom_call.1} parent=39 // pred_fallthru
          _
        %s334 = sand.u32 %s30, 1
        %s335 = scalar_lea.sflag [#allocation8], %s334
        %s336 = sand.u32 %s89, 1
        %s337 = smul.addr %s336, 8
        %s338 = scalar_lea.vmem [#allocation7], %s337
        // Predicated region
        $region45: #{tpu_custom_call.1} parent=39 // pred_check
          %p339 = pneg %p102
        $region46: #{tpu_custom_call.1} parent=39 // pred_check_branch
          %341 = sbr.rel (%p339) target = $region48
        $region47: #{tpu_custom_call.1} parent=39 // pred_region
          %342 = dma.done %s335, 128
        $region48: #{tpu_custom_call.1} parent=39 // pred_fallthru
          _
        %s343 = sand.u32 %s30, 1
        %s344 = scalar_lea.sflag [#allocation8], %s343
        %s345 = sand.u32 %s117, 1
        %s346 = scalar_lea.vmem [#allocation9], %s345
        // Predicated region
        $region49: #{tpu_custom_call.1} parent=39 // pred_check
          %p347 = pneg %p130
        $region50: #{tpu_custom_call.1} parent=39 // pred_check_branch
          %349 = sbr.rel (%p347) target = $region52
        $region51: #{tpu_custom_call.1} parent=39 // pred_region
          %350 = dma.done %s344, 16
        $region52: #{tpu_custom_call.1} parent=39 // pred_fallthru
          _
        %s351 = sand.u32 %s61, 1
        %s352 = scalar_lea.sflag [#allocation5], %s351
        %s353 = sand.u32 %s61, 1
        %s354 = smul.addr %s353, 16
        %s355 = scalar_lea.vmem [#allocation4], %s354
        %p356 = pneg %p74
        %p357 = pneg %p71
        %s358 = sand.u32 %s30, 1
        %s359 = scalar_lea.sflag [#allocation8], %s358
        %s360 = sand.u32 %s89, 1
        %s361 = smul.addr %s360, 8
        %s362 = scalar_lea.vmem [#allocation7], %s361
        %p363 = pneg %p102
        %p364 = pneg %p99
        %s365 = sand.u32 %s30, 1
        %s366 = scalar_lea.sflag [#allocation8], %s365
        %s367 = sand.u32 %s117, 1
        %s368 = scalar_lea.vmem [#allocation9], %s367
        %p369 = pneg %p130
        %p370 = pneg %p127
        %p371 = pneg %p151
        %p372 = pneg %p148
        %p373 = pneg %p172
        %p374 = pneg %p169
        %p375 = pneg %p202
        %p376 = pneg %p199
        %s377 = sand.u32 %s189, 1
        %s378 = scalar_lea.sflag [#allocation6], %s377
        %s379 = sand.u32 %s189, 1
        %s380 = smul.addr %s379, 16
        %s381 = scalar_lea.vmem [#allocation10], %s380
        %s382 = smul.u32 2, %s36
        %s383 = smul.u32 2, %s37
        %s384 = sld [smem:[#allocation3 + %s35]]
        %s385 = sld [smem:[#allocation3 + %s35]]
        %s386 = smul.u32 2, %s36
        %s387 = smul.u32 2, %s37
        %v389 = vld [vmem:[%s329] sm:$0xf]
        %v390 = vld [vmem:[%s329 + $0x4] sm:$0xf]
        %v391 = vld [vmem:[%s329 + $0x8] sm:$0xf]
        %v392 = vld [vmem:[%s329 + $0xc] sm:$0xf]
        %v393 = vld [vmem:[%s338] sm:$0xf]
        %v394 = vld [vmem:[%s338 + $0x4] sm:$0xf]
        %v395 = vld [vmem:[%s346] sm:$0x1]
        %v397 = vlaneseq
        %v398 = vshrl.u32 %v397, 7
        %v399 = vsub.s32 0, %v398
        %v400 = vrot.slane %v395, %v399
        %v406 = vunpack.c.l.b16 %v389
        %v407 = vunpack.c.l.b16 %v390
        %v408 = vunpack.c.l.b16 %v391
        %v409 = vunpack.c.l.b16 %v392
        %v410 = vpack.c.b16 %v407, %v406
        %v411 = vpack.c.b16 %v409, %v408
        %v414 = vunpack.c.l.b16 %v393
        %v415 = vunpack.c.l.b16 %v394
        %v416 = vpack.c.b16 %v415, %v414
        %vm418 = vcmask 130048
        %v420 = vsel %vm418, %v410, 0
        %v423 = vsel %vm418, %v411, 0
        %425 = vmatprep.subr.bf16.mxu0 0
        %426 = vmatpush1.bf16.msra.mxu0 0
        %427 = vmatprep.subr.bf16.mxu0 0
        %428 = vmatpush1.bf16.msra.mxu0 0
        %429 = vmatprep.subr.bf16.mxu0 0
        %430 = vmatpush1.bf16.msra.mxu0 0
        %431 = vmatprep.subr.bf16.mxu0 0
        %432 = vmatpush1.bf16.msra.mxu0 0
        %433 = vmatprep.subr.bf16.mxu0 0
        %434 = vmatpush1.bf16.msra.mxu0 0
        %435 = vmatprep.subr.bf16.mxu0 0
        %436 = vmatpush1.bf16.msra.mxu0 0
        %437 = vmatprep.subr.bf16.mxu0 0
        %438 = vmatpush1.bf16.msra.mxu0 0
        %439 = vmatprep.subr.bf16.mxu0 0
        %440 = vmatpush1.bf16.msra.mxu0 %v416
        %441 = vmatprep.subr.bf16.mxu0 0
        %442 = vmatpush2.bf16.msra.mxu0 0
        %443 = vmatprep.subr.bf16.mxu0 0
        %444 = vmatpush2.bf16.msra.mxu0 0
        %445 = vmatprep.subr.bf16.mxu0 0
        %446 = vmatpush2.bf16.msra.mxu0 0
        %447 = vmatprep.subr.bf16.mxu0 0
        %448 = vmatpush2.bf16.msra.mxu0 0
        %449 = vmatprep.subr.bf16.mxu0 0
        %450 = vmatpush2.bf16.msra.mxu0 0
        %451 = vmatprep.subr.bf16.mxu0 0
        %452 = vmatpush2.bf16.msra.mxu0 0
        %453 = vmatprep.subr.bf16.mxu0 0
        %454 = vmatpush2.bf16.msra.mxu0 0
        %455 = vmatprep.subr.bf16.mxu0 0
        %456 = vmatpush2.bf16.msra.mxu0 0
        %457 = vmatprep.mubr.bf16.mxu0 0
        %458 = vmatmul.mubr.bf16.gmra.mxu0 %v420
        %v459 = vpop.f32.mrf.mxu0
        %v460 = vadd.f32 %v400, %v459
        %v461 = vpop.f32.mrf.mxu0
        %v462 = vpop.f32.mrf.mxu0
        %v463 = vadd.f32 %v400, %v462
        %v464 = vpop.f32.mrf.mxu0
        %465 = vmatprep.mubr.bf16.mxu0 0
        %466 = vmatmul.mubr.bf16.gmra.mxu0 %v423
        %v467 = vpop.f32.mrf.mxu0
        %v468 = vadd.f32 %v400, %v467
        %v469 = vpop.f32.mrf.mxu0
        %v470 = vpop.f32.mrf.mxu0
        %v471 = vadd.f32 %v400, %v470
        %v472 = vpop.f32.mrf.mxu0
        %473 = vdwg.mxu0
        %474 = vadd.xlane.f32.xlu0 %v460
        %v475 = vpop.xlane.xlu0 %474
        %476 = vadd.xlane.f32.xlu0 %v463
        %v477 = vpop.xlane.xlu0 %476
        %478 = vadd.xlane.f32.xlu0 %v468
        %v479 = vpop.xlane.xlu0 %478
        %480 = vadd.xlane.f32.xlu0 %v471
        %v481 = vpop.xlane.xlu0 %480
        %v482 = vrcp.pop 128.0
        %v483 = vmul.f32 %v475, %v482
        %v484 = vmul.f32 %v477, %v482
        %v485 = vmul.f32 %v479, %v482
        %v486 = vmul.f32 %v481, %v482
        %v487 = vsub.f32 %v460, %v483
        %v488 = vsub.f32 %v463, %v484
        %v489 = vsub.f32 %v468, %v485
        %v490 = vsub.f32 %v471, %v486
        %v491 = vmul.f32 %v487, %v487
        %v492 = vmul.f32 %v488, %v488
        %v493 = vmul.f32 %v489, %v489
        %v494 = vmul.f32 %v490, %v490
        %495 = vadd.xlane.f32.xlu0 %v491
        %v496 = vpop.xlane.xlu0 %495
        %497 = vadd.xlane.f32.xlu0 %v492
        %v498 = vpop.xlane.xlu0 %497
        %499 = vadd.xlane.f32.xlu0 %v493
        %v500 = vpop.xlane.xlu0 %499
        %501 = vadd.xlane.f32.xlu0 %v494
        %v502 = vpop.xlane.xlu0 %501
        %v503 = vmul.f32 %v496, %v482
        %v504 = vmul.f32 %v498, %v482
        %v505 = vmul.f32 %v500, %v482
        %v506 = vmul.f32 %v502, %v482
        %v507 = vadd.f32 %v503, 1e-05
        %v508 = vadd.f32 %v504, 1e-05
        %v509 = vadd.f32 %v505, 1e-05
        %v510 = vadd.f32 %v506, 1e-05
        %v511 = vrsqrt.pop %v507
        %v512 = vrsqrt.pop %v508
        %v513 = vrsqrt.pop %v509
        %v514 = vrsqrt.pop %v510
        %v515 = vmul.f32 %v487, %v511
        %v516 = vmul.f32 %v488, %v512
        %v517 = vmul.f32 %v489, %v513
        %v518 = vmul.f32 %v490, %v514
        %v519 = vld [vmem:[%s4] sm:$0x1]
        %v521 = vlaneseq
        %v522 = vshrl.u32 %v521, 7
        %v523 = vsub.s32 0, %v522
        %v524 = vrot.slane %v519, %v523
        %v526 = vmul.f32 %v515, %v524
        %v527 = vmul.f32 %v516, %v524
        %v528 = vmul.f32 %v517, %v524
        %v529 = vmul.f32 %v518, %v524
        %v530 = vld [vmem:[%s5] sm:$0x1]
        %v532 = vlaneseq
        %v533 = vshrl.u32 %v532, 7
        %v534 = vsub.s32 0, %v533
        %v535 = vrot.slane %v530, %v534
        %v537 = vadd.f32 %v526, %v535
        %v538 = vadd.f32 %v527, %v535
        %v539 = vadd.f32 %v528, %v535
        %v540 = vadd.f32 %v529, %v535
        %v541 = vpack.c.bf16 %v538, %v537
        %v542 = vpack.c.bf16 %v540, %v539
        %v545 = vunpack.c.l.b16 %v541
        %v546 = vunpack.c.h.b16 %v541
        %v547 = vunpack.c.l.b16 %v542
        %v548 = vunpack.c.h.b16 %v542
        %v549 = vpack.c.b16 %v545, %v545
        %v550 = vpack.c.b16 %v546, %v546
        %v551 = vpack.c.b16 %v547, %v547
        %v552 = vpack.c.b16 %v548, %v548
        %557 = vst [vmem:[%s381] sm:$0xf] %v549
        %558 = vst [vmem:[%s381 + $0x4] sm:$0xf] %v550
        %559 = vst [vmem:[%s381 + $0x8] sm:$0xf] %v551
        %560 = vst [vmem:[%s381 + $0xc] sm:$0xf] %v552
        %s561 = sand.u32 %s189, 1
        %s562 = scalar_lea.sflag [#allocation6], %s561
        %s563 = sand.u32 %s189, 1
        %s564 = smul.addr %s563, 16
        %s565 = scalar_lea.vmem [#allocation10], %s564
        // Predicated region
        $region53: #{tpu_custom_call.1} parent=39 // pred_check
          %p566 = pneg %p199
        $region54: #{tpu_custom_call.1} parent=39 // pred_check_branch
          %568 = sbr.rel (%p566) target = $region56
        $region55: #{tpu_custom_call.1} parent=39 // pred_region
          #allocation14 [shape = 'u32[6]{0}', space=smem, size = 0x18, scoped, tag = 'DMA stride descriptor']
          %s569 = smul.u32 2, %s36
          %s570 = smul.u32 2, %s37
          %s572 = ssub.s32 256, 256
          %573 = vsyncadd %s562, %s572
          %s574 = smul.addr %s35, 2
          %s575 = sadd.s32 %s570, %s574
          %s576 = smul.addr %s569, 4
          %s577 = sadd.s32 %s575, %s576
          %s578 = smul.addr %s577, 64
          %s579 = scalar_lea.hbm %s6, %s578
          %s581 = sshll.u32 1, 14
          %s582 = sxor.u32 4294967295, %s581
          %s585 = sshll.u32 7, 18
          %s586 = sxor.u32 4294967295, %s585
          %s587 = sand.u32 0, %s586
          %s589 = sor.u32 %s587, 0
          %s590 = sshll.u32 %s565, 4
          %s591 = int_to_ptr.vmem [resolvable:$true] %s590
          %597 = sst [smem:[#allocation14]] 128
          %s598 = scalar_lea.smem [#allocation14], 1
          %599 = sst [smem:[%s598]] 256
          %s600 = scalar_lea.smem [#allocation14], 2
          %601 = sst [smem:[%s600]] 2
          %s602 = scalar_lea.smem [#allocation14], 3
          %603 = sst [smem:[%s602]] 64
          %s604 = scalar_lea.smem [#allocation14], 4
          %605 = sst [smem:[%s604]] 64
          %s606 = scalar_lea.smem [#allocation14], 5
          %607 = sst [smem:[%s606]] 4
          %609 = dma.general %s591, 256, %s579, %s562, 131072, [#allocation14], %s589, 0
        $region56: #{tpu_custom_call.1} parent=39 // pred_fallthru
          _
      $region40: #{tpu_custom_call.1} parent=5 // pred_fallthru
        _
      %p610 = scmp.le.s32.totalorder 2, %s25
      // Predicated region
      $region57: #{tpu_custom_call.1} parent=5 // pred_check
        %p611 = pneg %p610
      $region58: #{tpu_custom_call.1} parent=5 // pred_check_branch
        %613 = sbr.rel (%p611) target = $region60
      $region59: #{tpu_custom_call.1} parent=5 // pred_region
        %s614 = ssub.s32 %s25, 2
        // Predicated region
        $region61: #{tpu_custom_call.1} parent=59 // pred_check
          %p615 = pneg %p205
        $region62: #{tpu_custom_call.1} parent=59 // pred_check_branch
          %617 = sbr.rel (%p615) target = $region64
        $region63: #{tpu_custom_call.1} parent=59 // pred_region
          %s618 = sand.u32 %s190, 1
          %s619 = scalar_lea.sflag [#allocation6], %s618
          %s620 = sand.u32 %s190, 1
          %s621 = smul.addr %s620, 16
          %s622 = scalar_lea.vmem [#allocation10], %s621
          %623 = dma.done %s619, 256
        $region64: #{tpu_custom_call.1} parent=59 // pred_fallthru
          _
      $region60: #{tpu_custom_call.1} parent=5 // pred_fallthru
        _
    $region6: #{tpu_custom_call.1} parent=1 // loop_footer
      %s29 = sadd.s32 1, %s25
    $region7: #{tpu_custom_call.1} parent=1 // loop_footer_branch
      %24 = sbr.rel target = $region3
    $region8: #{tpu_custom_call.1} parent=1 // loop_exit
      _
    %624 = vsyncpa [#allocation5], 1
    %s625 = scalar_lea.sflag [#allocation5], 1
    %626 = vsyncpa %s625, 1
    %627 = vsyncpa [#allocation8], 1
    %s628 = scalar_lea.sflag [#allocation8], 1
    %629 = vsyncpa %s628, 1
    %630 = vsyncpa [#allocation6], 1
    %s631 = scalar_lea.sflag [#allocation6], 1
    %632 = vsyncpa %s631, 1

</llo_original>
